<compile_context>
chip_gen: v7x
topology: tpu7x:2x2x1
jax: 0.10.0
libtpu: 0.0.40
codegen_flags: <defaults>
</compile_context>

<pallas_src>
import functools

import jax
import jax.numpy as jnp
from jax.experimental import pallas as pl
from jax.experimental.pallas import tpu as pltpu

_LANES = 128


# --------------------------------------------------------------------------- #
# Kernel
# --------------------------------------------------------------------------- #
def _nf_packed_kernel(x_ref, a_ref, u_ref, b_ref, c_ref, o_ref, *, num_flow):
    """Lane-packed planar-flow stack.

    x_ref : (tile_rows, 128)          packed input; lane = (sample % group)*d_pad + feat
    a_ref : (128, num_flow*128) bf16  concatenated block-diagonal reduce+broadcast mats
    u_ref : (num_flow, 128)           u_k tiled across the 128/d_pad sample groups
    b_ref : (num_flow,)      [SMEM]   per-flow scalar bias
    c_ref : (num_flow**2,)   [SMEM]   flattened coupling scalars c[j,k] = <u_j, w_k>
    o_ref : (tile_rows, 128)          packed output
    """
    z = x_ref[...].astype(jnp.float32)                              # (T, 128)

    # One wide bf16 MXU matmul gives every flow's <z0, w_k>, already broadcast
    # over each sample's d_pad feature lanes (block-diagonal RHS).
    s = jnp.dot(z.astype(jnp.bfloat16), a_ref[...],
                preferred_element_type=jnp.float32)                 # (T, K*128)

    t_prev = []
    for k in range(num_flow):                  # static -> unrolled, flows sequential
        arg = s[:, k * _LANES:(k + 1) * _LANES] + b_ref[k]
        for j in range(k):                     # scalar-coefficient recurrence (VPU FMA)
            arg = arg + c_ref[j * num_flow + k] * t_prev[j]
        t = jnp.tanh(arg.astype(jnp.bfloat16))                      # bf16 EUP path
        z = z + u_ref[k:k + 1, :] * t
        t_prev.append(t)

    o_ref[...] = z.astype(o_ref.dtype)


# --------------------------------------------------------------------------- #
# Wrappers
# --------------------------------------------------------------------------- #
def _cost_estimate(r, num_flow, itemsize):
    # One (r,128)@(128,K*128) matmul + K elementwise passes; x read+write once.
    return pl.CostEstimate(
        flops=2 * num_flow * r * _LANES * _LANES + 6 * num_flow * r * _LANES,
        transcendentals=num_flow * r * _LANES,
        bytes_accessed=2 * r * _LANES * itemsize + num_flow * _LANES * _LANES * 2,
    )


def _nf_forward_packed(x, u, w, b, *, tile_rows, max_tile_rows):
    n, d = x.shape
    num_flow = u.shape[0]
    dtype = x.dtype

    # Pad the feature dim up to the next power of two (a divisor of 128) with
    # zeroed x/w/u columns -- identical math, lane-dense everywhere.
    d_pad = 1
    while d_pad < d:
        d_pad *= 2
    group = _LANES // d_pad                     # samples packed per 128-lane row

    x_p = jnp.pad(x, ((0, 0), (0, d_pad - d)))
    u_p = jnp.pad(u.astype(jnp.float32), ((0, 0), (0, d_pad - d)))
    w_p = jnp.pad(w.astype(jnp.float32), ((0, 0), (0, d_pad - d)))

    # Pad batch so the packed row count is a multiple of 8 (sublane alignment).
    chunk = group * 8
    n_pad = ((n + chunk - 1) // chunk) * chunk
    if n_pad != n:
        x_p = jnp.pad(x_p, ((0, n_pad - n), (0, 0)))
    r = n_pad // group
    xp = x_p.reshape(r, _LANES)                 # contiguous relayout, zero copy

    # A_k = I_group (x) (w_k 1^T):  (z @ A_k)[.., h*d_pad+e] = <z_sample_h, w_k>
    eye_g = jnp.eye(group, dtype=jnp.float32)
    blk = w_p[:, :, None] * jnp.ones((1, 1, d_pad), jnp.float32)    # (K, d_pad, d_pad)
    a = jnp.einsum("gh,kfe->kgfhe", eye_g, blk).reshape(num_flow, _LANES, _LANES)
    a_wide = jnp.transpose(a, (1, 0, 2)).reshape(_LANES, num_flow * _LANES)
    a_wide = a_wide.astype(jnp.bfloat16)                            # halve VMEM/DMA

    u_tiled = jnp.tile(u_p, (1, group))                             # (K, 128) f32
    c_flat = (u_p @ w_p.T).reshape(num_flow * num_flow)             # c[j,k]=<u_j,w_k>
    b_vec = b.reshape(num_flow).astype(jnp.float32)

    # Tile selection: always grid with a Pallas-masked tail; aim for >= 4
    # pipelined grid steps (>= 2 per TensorCore on v7x), cap tile size so
    # resident VMEM stays modest.  (v7x can raise max_tile_rows; v5e can lower.)
    max_tile_rows = max(8, int(max_tile_rows) // 8 * 8)
    if tile_rows is None:
        tile_rows = r // 4
    tile_rows = int(tile_rows) // 8 * 8
    tile_rows = max(8, min(tile_rows, r, max_tile_rows))

    grid = (pl.cdiv(r, tile_rows),)             # ragged tail handled by Pallas masking
    kernel = functools.partial(_nf_packed_kernel, num_flow=num_flow)

    out = pl.pallas_call(
        kernel,
        out_shape=jax.ShapeDtypeStruct((r, _LANES), dtype),
        grid_spec=pltpu.PrefetchScalarGridSpec(
            num_scalar_prefetch=0,
            grid=grid,
            in_specs=[
                pl.BlockSpec((tile_rows, _LANES), lambda i: (i, 0)),           # x
                pl.BlockSpec((_LANES, num_flow * _LANES), lambda i: (0, 0)),   # A (bf16)
                pl.BlockSpec((num_flow, _LANES), lambda i: (0, 0)),            # u tiled
                pl.BlockSpec(memory_space=pltpu.MemorySpace.SMEM),             # b
                pl.BlockSpec(memory_space=pltpu.MemorySpace.SMEM),             # c
            ],
            out_specs=pl.BlockSpec((tile_rows, _LANES), lambda i: (i, 0)),
        ),
        compiler_params=pltpu.CompilerParams(
            dimension_semantics=("parallel",),
            vmem_limit_bytes=48 * 1024 * 1024),
        cost_estimate=_cost_estimate(r, num_flow, dtype.itemsize),
    )(xp, a_wide, u_tiled, b_vec, c_flat)

    return out.reshape(n_pad, d_pad)[:n, :d]


def nf_forward(x, u, w, b, *, tile_rows=None, max_tile_rows=4096):
    """NF.forward(X): sequentially apply num_flow planar flows to X of shape (N, d)."""
    n, d = x.shape
    assert u.shape == w.shape and u.shape[1] == d and b.shape[0] == u.shape[0]
    if d > _LANES:
        # TODO(synk): window_size > 128 has no lane-packed Pallas path here; pure-JAX fallback.
        return nf_reference(x, u, w, b)
    return _nf_forward_packed(x, u, w, b, tile_rows=tile_rows,
                              max_tile_rows=max_tile_rows)


def nf_reference(x, u, w, b):
    """Pure-JAX reference of the PyTorch forward (exact f32, no MXU)."""
    z = x.astype(jnp.float32)
    b = b.reshape(-1)
    for k in range(u.shape[0]):
        arg = jnp.sum(z * w[k][None, :], axis=-1, keepdims=True) + b[k]
        z = z + u[k][None, :] * jnp.tanh(arg)
    return z.astype(x.dtype)


def _check(x, u, w, b, tile_rows=None, tol=3e-3):
    y = jax.block_until_ready(nf_forward(x, u, w, b, tile_rows=tile_rows))
    y_ref = nf_reference(x, u, w, b)
    assert y.shape == x.shape
    err = float(jnp.max(jnp.abs(y.astype(jnp.float32) - y_ref.astype(jnp.float32))))
    scale = float(jnp.maximum(1.0, jnp.max(jnp.abs(y_ref))))
    assert err < tol * scale, f"max abs err {err} (scale {scale})"


if __name__ == "__main__":
    key = jax.random.PRNGKey(0)
    kx1, kx2, kx3, ku, kw, kb = jax.random.split(key, 6)

    # NF(args) with args.window_size = 8, args.num_flow = 3.
    window_size, num_flow = 8, 3
    # PlanarFlow.__init__ draws u, w ~ N(0, 0.01) and b = 0; larger values are
    # used here only so the numerical check is meaningful -- the kernel is
    # parameter-agnostic and the forward semantics are identical.
    u = 0.1 * jax.random.normal(ku, (num_flow, window_size), jnp.float32)
    w = 0.1 * jax.random.normal(kw, (num_flow, window_size), jnp.float32)
    b = 0.2 * jax.random.normal(kb, (num_flow,), jnp.float32)

    # 1) even batch: explicit 4-step grid, then the automatic >=4-step tiling.
    x1 = jax.random.normal(kx1, (1024, window_size), jnp.float32)
    _check(x1, u, w, b, tile_rows=16)
    _check(x1, u, w, b)

    # 2) ragged batch -> wrapper pad + Pallas-masked tail block.
    x2 = jax.random.normal(kx2, (1000, window_size), jnp.float32)
    _check(x2, u, w, b, tile_rows=16)

    # 3) window size that does not divide 128 -> zero-padded onto the packed path.
    x3 = jax.random.normal(kx3, (40, 6), jnp.float32)
    _check(x3, u[:, :6], w[:, :6], b)

    print("KERNEL_OK")
</pallas_src>

<mosaic_0001>
module attributes {stable_mosaic.version = 11 : i64} {
  func.func @_nf_packed_kernel(%arg0: i32, %arg1: memref<16x128xf32, #tpu.memory_space<vmem>>, %arg2: memref<128x384xbf16, #tpu.memory_space<vmem>>, %arg3: memref<3x128xf32, #tpu.memory_space<vmem>>, %arg4: memref<3xf32, #tpu.memory_space<smem>>, %arg5: memref<9xf32, #tpu.memory_space<smem>>, %arg6: memref<16x128xf32, #tpu.memory_space<vmem>>) attributes {dimension_semantics = [#tpu.dimension_semantics<parallel>], iteration_bounds = array<i64: 4>, scalar_prefetch = 0 : i64, scratch_operands = 0 : i64, tpu.core_type = #tpu.core_type<tc>, window_params = [{transform_indices = @transform_0, window_bounds = array<i64: 16, 128>}, {pipeline_mode = #tpu.pipeline_mode<synchronous>, transform_indices = @transform_1, window_bounds = array<i64: 128, 384>}, {pipeline_mode = #tpu.pipeline_mode<synchronous>, transform_indices = @transform_2, window_bounds = array<i64: 3, 128>}, {transform_indices = @transform_3, window_bounds = array<i64: 3>}, {transform_indices = @transform_4, window_bounds = array<i64: 9>}, {transform_indices = @transform_5, window_bounds = array<i64: 16, 128>}]} {
    %c0 = arith.constant 0 : index
    %c0_0 = arith.constant 0 : index
    %0 = vector.load %arg1[%c0, %c0_0] : memref<16x128xf32, #tpu.memory_space<vmem>>, vector<16x128xf32>
    %1 = arith.truncf %0 : vector<16x128xf32> to vector<16x128xbf16>
    %c0_1 = arith.constant 0 : index
    %c0_2 = arith.constant 0 : index
    %2 = vector.load %arg2[%c0_1, %c0_2] : memref<128x384xbf16, #tpu.memory_space<vmem>>, vector<128x384xbf16>
    %cst = arith.constant dense<0.000000e+00> : vector<16x384xf32>
    %3 = tpu.matmul %1, %2, %cst {dimension_numbers = #tpu.dot_dimension_numbers<[1], [0], [0], [1], [0, 0, 1, 1], [], []>} : vector<16x128xbf16>, vector<128x384xbf16>, vector<16x384xf32> -> vector<16x384xf32>
    %4 = vector.extract_strided_slice %3 {offsets = [0, 0], sizes = [16, 128], strides = [1, 1]} : vector<16x384xf32> to vector<16x128xf32>
    %c0_3 = arith.constant 0 : index
    %5 = memref.load %arg4[%c0_3] : memref<3xf32, #tpu.memory_space<smem>>
    %6 = vector.broadcast %5 : f32 to vector<16x128xf32>
    %7 = arith.addf %4, %6 : vector<16x128xf32>
    %8 = arith.truncf %7 : vector<16x128xf32> to vector<16x128xbf16>
    %9 = math.tanh %8 : vector<16x128xbf16>
    %c0_4 = arith.constant 0 : index
    %c0_5 = arith.constant 0 : index
    %10 = vector.load %arg3[%c0_4, %c0_5] : memref<3x128xf32, #tpu.memory_space<vmem>>, vector<1x128xf32>
    %11 = arith.extf %9 : vector<16x128xbf16> to vector<16x128xf32>
    %12 = vector.broadcast %10 : vector<1x128xf32> to vector<16x128xf32>
    %13 = arith.mulf %12, %11 : vector<16x128xf32>
    %14 = arith.addf %0, %13 : vector<16x128xf32>
    %15 = vector.extract_strided_slice %3 {offsets = [0, 128], sizes = [16, 128], strides = [1, 1]} : vector<16x384xf32> to vector<16x128xf32>
    %c1 = arith.constant 1 : index
    %16 = memref.load %arg4[%c1] : memref<3xf32, #tpu.memory_space<smem>>
    %17 = vector.broadcast %16 : f32 to vector<16x128xf32>
    %18 = arith.addf %15, %17 : vector<16x128xf32>
    %c1_6 = arith.constant 1 : index
    %19 = memref.load %arg5[%c1_6] : memref<9xf32, #tpu.memory_space<smem>>
    %20 = arith.extf %9 : vector<16x128xbf16> to vector<16x128xf32>
    %21 = vector.broadcast %19 : f32 to vector<16x128xf32>
    %22 = arith.mulf %21, %20 : vector<16x128xf32>
    %23 = arith.addf %18, %22 : vector<16x128xf32>
    %24 = arith.truncf %23 : vector<16x128xf32> to vector<16x128xbf16>
    %25 = math.tanh %24 : vector<16x128xbf16>
    %c1_7 = arith.constant 1 : index
    %c0_8 = arith.constant 0 : index
    %26 = vector.load %arg3[%c1_7, %c0_8] : memref<3x128xf32, #tpu.memory_space<vmem>>, vector<1x128xf32>
    %27 = arith.extf %25 : vector<16x128xbf16> to vector<16x128xf32>
    %28 = vector.broadcast %26 : vector<1x128xf32> to vector<16x128xf32>
    %29 = arith.mulf %28, %27 : vector<16x128xf32>
    %30 = arith.addf %14, %29 : vector<16x128xf32>
    %31 = vector.extract_strided_slice %3 {offsets = [0, 256], sizes = [16, 128], strides = [1, 1]} : vector<16x384xf32> to vector<16x128xf32>
    %c2 = arith.constant 2 : index
    %32 = memref.load %arg4[%c2] : memref<3xf32, #tpu.memory_space<smem>>
    %33 = vector.broadcast %32 : f32 to vector<16x128xf32>
    %34 = arith.addf %31, %33 : vector<16x128xf32>
    %c2_9 = arith.constant 2 : index
    %35 = memref.load %arg5[%c2_9] : memref<9xf32, #tpu.memory_space<smem>>
    %36 = arith.extf %9 : vector<16x128xbf16> to vector<16x128xf32>
    %37 = vector.broadcast %35 : f32 to vector<16x128xf32>
    %38 = arith.mulf %37, %36 : vector<16x128xf32>
    %39 = arith.addf %34, %38 : vector<16x128xf32>
    %c5 = arith.constant 5 : index
    %40 = memref.load %arg5[%c5] : memref<9xf32, #tpu.memory_space<smem>>
    %41 = arith.extf %25 : vector<16x128xbf16> to vector<16x128xf32>
    %42 = vector.broadcast %40 : f32 to vector<16x128xf32>
    %43 = arith.mulf %42, %41 : vector<16x128xf32>
    %44 = arith.addf %39, %43 : vector<16x128xf32>
    %45 = arith.truncf %44 : vector<16x128xf32> to vector<16x128xbf16>
    %46 = math.tanh %45 : vector<16x128xbf16>
    %c2_10 = arith.constant 2 : index
    %c0_11 = arith.constant 0 : index
    %47 = vector.load %arg3[%c2_10, %c0_11] : memref<3x128xf32, #tpu.memory_space<vmem>>, vector<1x128xf32>
    %48 = arith.extf %46 : vector<16x128xbf16> to vector<16x128xf32>
    %49 = vector.broadcast %47 : vector<1x128xf32> to vector<16x128xf32>
    %50 = arith.mulf %49, %48 : vector<16x128xf32>
    %51 = arith.addf %30, %50 : vector<16x128xf32>
    %c0_12 = arith.constant 0 : index
    %c0_13 = arith.constant 0 : index
    %52 = vector.load %arg6[%c0_12, %c0_13] : memref<16x128xf32, #tpu.memory_space<vmem>>, vector<16x128xf32>
    tpu.vector_store %arg6[%c0_12, %c0_13], %51 {strides = array<i32>} : memref<16x128xf32, #tpu.memory_space<vmem>>, vector<16x128xf32>,
    return
  }
  func.func @transform_0(%arg0: i32) -> (i32, i32) {
    %c0_i32 = arith.constant 0 : i32
    %c0_i32_0 = arith.constant 0 : i32
    return %arg0, %c0_i32 : i32, i32
  }
  func.func @transform_1(%arg0: i32) -> (i32, i32) {
    %c0_i32 = arith.constant 0 : i32
    %c0_i32_0 = arith.constant 0 : i32
    %c0_i32_1 = arith.constant 0 : i32
    return %c0_i32, %c0_i32_0 : i32, i32
  }
  func.func @transform_2(%arg0: i32) -> (i32, i32) {
    %c0_i32 = arith.constant 0 : i32
    %c0_i32_0 = arith.constant 0 : i32
    %c0_i32_1 = arith.constant 0 : i32
    return %c0_i32, %c0_i32_0 : i32, i32
  }
  func.func @transform_3(%arg0: i32) -> i32 {
    %c0_i32 = arith.constant 0 : i32
    %c0_i32_0 = arith.constant 0 : i32
    return %c0_i32 : i32
  }
  func.func @transform_4(%arg0: i32) -> i32 {
    %c0_i32 = arith.constant 0 : i32
    %c0_i32_0 = arith.constant 0 : i32
    return %c0_i32 : i32
  }
  func.func @transform_5(%arg0: i32) -> (i32, i32) {
    %c0_i32 = arith.constant 0 : i32
    %c0_i32_0 = arith.constant 0 : i32
    return %arg0, %c0_i32 : i32, i32
  }
}

</mosaic_0001>

<llo_original>
// kernel: tpu_custom_call.1
$region0: #{tpu_custom_call.1}
  #allocation0 [shape = 'u32[]', space=smem, size = 0x4, offset = 0x4, fixed_abs, tag = 'smem constant byte address 0x4 - core index']
  #allocation1 [shape = 'u32[144,128]{1,0:T(1,128)}', space=vmem, size = 0x12000, scoped, tag = 'internal scratch']
  %s0 = inlined_call_operand.hbm [shape: f32[64,128], index: 0, kind: input, shape index: {}]
  %s1 = inlined_call_operand.hbm [shape: bf16[128,384], index: 1, kind: input, shape index: {}]
  %s2 = inlined_call_operand.vmem [shape: f32[3,128], index: 2, kind: input, shape index: {}]
  %s3 = inlined_call_operand.vmem [shape: f32[3], index: 3, kind: input, shape index: {}]
  %s4 = inlined_call_operand.vmem [shape: f32[9], index: 4, kind: input, shape index: {}]
  %s5 = inlined_call_operand.hbm [shape: f32[64,128], index: 5, kind: output, shape index: {}]
  %s6 = sld [smem:[#allocation0]]
  $region69: #{tpu_custom_call.1} parent=0
    _
  %s8 = ssub.s32 1, %s6
  %s9 = scalar_select 0, %s8, %s6
  $region1: #{tpu_custom_call.1} parent=0
    #allocation2 [shape = 'u8[16384]{0}', space=vmem, size = 0x4000, scoped, tag = 'input window, operand 0']
    #allocation3 [shape = 's32[2]{0}', space=sflag, size = 0x8, scoped, tag = 'scoped memory for tpu_custom_call.1']
    #allocation4 [shape = 's32[2]{0}', space=sflag, size = 0x8, scoped, tag = 'scoped memory for tpu_custom_call.1']
    #allocation5 [shape = 's32[2]{0}', space=sflag, size = 0x8, scoped, tag = 'scoped memory for tpu_custom_call.1']
    #allocation6 [shape = 'u8[98304]{0}', space=vmem, size = 0x18000, scoped, tag = 'input window, operand 1, single buffered']
    #allocation7 [shape = 's32[1]{0}', space=sflag, size = 0x4, scoped, tag = 'scoped memory for tpu_custom_call.1']
    #allocation8 [shape = 'u8[512]{0}', space=smem, size = 0x200, scoped, tag = 'input window, operand 3, single buffered']
    #allocation9 [shape = 'u8[512]{0}', space=smem, size = 0x200, scoped, tag = 'input window, operand 4, single buffered']
    #allocation10 [shape = 's32[1]{0}', space=sflag, size = 0x4, scoped, tag = 'scoped memory for tpu_custom_call.1']
    #allocation11 [shape = 'u8[16384]{0}', space=vmem, size = 0x4000, scoped, tag = 'output window, operand 0']
    %10 = vsyncpa [#allocation3], 0
    %s11 = scalar_lea.sflag [#allocation3], 1
    %12 = vsyncpa %s11, 0
    %13 = vsyncpa [#allocation7], 0
    %14 = vsyncpa [#allocation5], 0
    %15 = vsyncpa [#allocation10], 0
    %16 = vsyncpa [#allocation4], 0
    %s17 = scalar_lea.sflag [#allocation4], 1
    %18 = vsyncpa %s17, 0
    loop: start=0, step=1, limit=6
    $region2: #{tpu_custom_call.1} parent=1 // loop_pre_header
      _
    $region3: #{tpu_custom_call.1} parent=1 // loop_header
      %s20 = sphi 0, %s24
      %p21 = scmp.ge.s32.totalorder %s20, 6
      %s30 = sphi 0, %s32
      %s33 = sphi 0, %s30
      %s34 = sphi 0, %s33
      %s50 = sphi 0, %s34
      %s54 = sphi 0, %s54
      %s56 = sphi 0, %s54
      %s57 = sphi 0, %s56
      %s71 = sphi 0, %s57
      %s75 = sphi 0, %s75
      %s77 = sphi 0, %s75
      %s78 = sphi 0, %s77
      %s92 = sphi 0, %s78
      %s96 = sphi 0, %s96
      %s98 = sphi 0, %s96
      %s99 = sphi 0, %s98
      %s113 = sphi 0, %s99
      %s117 = sphi 0, %s117
      %s119 = sphi 0, %s117
      %s120 = sphi 0, %s119
      %s134 = sphi 0, %s120
      %s140 = sphi 0, %s142
      %s143 = sphi 0, %s140
      %s144 = sphi 0, %s143
      %s160 = sphi 0, %s144
    $region4: #{tpu_custom_call.1} parent=1 // loop_header_branch
      %23 = sbr.rel (%p21) target = $region8
    $region5: #{tpu_custom_call.1} parent=1 // loop_body
      %s25 = ssub.s32 %s20, 1
      %s26 = ssub.s32 %s20, 2
      %s27 = sadd.s32 %s20, 1
      %s28 = ssub.s32 %s20, %s27
      %p29 = scmp.eq.s32.totalorder %s28, 0
      %s31 = sadd.s32 %s30, 1
      %s32 = scalar_select %p29, %s30, %s31
      %p35 = pneg %p29
      %p36 = scmp.eq.s32.totalorder %s20, 3
      %p37 = por %p35, %p36
      %p38 = scmp.ne.s32.totalorder %s30, %s33
      %p39 = scmp.eq.s32.totalorder %s20, 0
      %p40 = por %p38, %p39
      %p41 = scmp.ne.s32.totalorder %s30, %s33
      %p42 = scmp.eq.s32.totalorder %s25, 3
      %p43 = por %p41, %p42
      %p44 = scmp.ne.s32.totalorder %s33, %s34
      %p45 = scmp.eq.s32.totalorder %s25, 0
      %p46 = por %p44, %p45
      %p47 = scmp.ne.s32.totalorder %s33, %s34
      %p48 = scmp.eq.s32.totalorder %s26, 3
      %p49 = por %p47, %p48
      %p51 = scmp.ne.s32.totalorder %s34, %s50
      %p52 = scmp.eq.s32.totalorder %s26, 0
      %p53 = por %p51, %p52
      %s55 = sadd.s32 %s54, 1
      %p58 = scmp.eq.s32.totalorder %s20, 3
      %p59 = scmp.ne.s32.totalorder %s54, %s56
      %p60 = scmp.eq.s32.totalorder %s20, 0
      %p61 = por %p59, %p60
      %p62 = scmp.ne.s32.totalorder %s54, %s56
      %p63 = scmp.eq.s32.totalorder %s25, 3
      %p64 = por %p62, %p63
      %p65 = scmp.ne.s32.totalorder %s56, %s57
      %p66 = scmp.eq.s32.totalorder %s25, 0
      %p67 = por %p65, %p66
      %p68 = scmp.ne.s32.totalorder %s56, %s57
      %p69 = scmp.eq.s32.totalorder %s26, 3
      %p70 = por %p68, %p69
      %p72 = scmp.ne.s32.totalorder %s57, %s71
      %p73 = scmp.eq.s32.totalorder %s26, 0
      %p74 = por %p72, %p73
      %s76 = sadd.s32 %s75, 1
      %p79 = scmp.eq.s32.totalorder %s20, 3
      %p80 = scmp.ne.s32.totalorder %s75, %s77
      %p81 = scmp.eq.s32.totalorder %s20, 0
      %p82 = por %p80, %p81
      %p83 = scmp.ne.s32.totalorder %s75, %s77
      %p84 = scmp.eq.s32.totalorder %s25, 3
      %p85 = por %p83, %p84
      %p86 = scmp.ne.s32.totalorder %s77, %s78
      %p87 = scmp.eq.s32.totalorder %s25, 0
      %p88 = por %p86, %p87
      %p89 = scmp.ne.s32.totalorder %s77, %s78
      %p90 = scmp.eq.s32.totalorder %s26, 3
      %p91 = por %p89, %p90
      %p93 = scmp.ne.s32.totalorder %s78, %s92
      %p94 = scmp.eq.s32.totalorder %s26, 0
      %p95 = por %p93, %p94
      %s97 = sadd.s32 %s96, 1
      %p100 = scmp.eq.s32.totalorder %s20, 3
      %p101 = scmp.ne.s32.totalorder %s96, %s98
      %p102 = scmp.eq.s32.totalorder %s20, 0
      %p103 = por %p101, %p102
      %p104 = scmp.ne.s32.totalorder %s96, %s98
      %p105 = scmp.eq.s32.totalorder %s25, 3
      %p106 = por %p104, %p105
      %p107 = scmp.ne.s32.totalorder %s98, %s99
      %p108 = scmp.eq.s32.totalorder %s25, 0
      %p109 = por %p107, %p108
      %p110 = scmp.ne.s32.totalorder %s98, %s99
      %p111 = scmp.eq.s32.totalorder %s26, 3
      %p112 = por %p110, %p111
      %p114 = scmp.ne.s32.totalorder %s99, %s113
      %p115 = scmp.eq.s32.totalorder %s26, 0
      %p116 = por %p114, %p115
      %s118 = sadd.s32 %s117, 1
      %p121 = scmp.eq.s32.totalorder %s20, 3
      %p122 = scmp.ne.s32.totalorder %s117, %s119
      %p123 = scmp.eq.s32.totalorder %s20, 0
      %p124 = por %p122, %p123
      %p125 = scmp.ne.s32.totalorder %s117, %s119
      %p126 = scmp.eq.s32.totalorder %s25, 3
      %p127 = por %p125, %p126
      %p128 = scmp.ne.s32.totalorder %s119, %s120
      %p129 = scmp.eq.s32.totalorder %s25, 0
      %p130 = por %p128, %p129
      %p131 = scmp.ne.s32.totalorder %s119, %s120
      %p132 = scmp.eq.s32.totalorder %s26, 3
      %p133 = por %p131, %p132
      %p135 = scmp.ne.s32.totalorder %s120, %s134
      %p136 = scmp.eq.s32.totalorder %s26, 0
      %p137 = por %p135, %p136
      %s138 = ssub.s32 %s20, %s27
      %p139 = scmp.eq.s32.totalorder %s138, 0
      %s141 = sadd.s32 %s140, 1
      %s142 = scalar_select %p139, %s140, %s141
      %p145 = pneg %p139
      %p146 = scmp.eq.s32.totalorder %s20, 3
      %p147 = por %p145, %p146
      %p148 = scmp.ne.s32.totalorder %s140, %s143
      %p149 = scmp.eq.s32.totalorder %s20, 0
      %p150 = por %p148, %p149
      %p151 = scmp.ne.s32.totalorder %s140, %s143
      %p152 = scmp.eq.s32.totalorder %s25, 3
      %p153 = por %p151, %p152
      %p154 = scmp.ne.s32.totalorder %s143, %s144
      %p155 = scmp.eq.s32.totalorder %s25, 0
      %p156 = por %p154, %p155
      %p157 = scmp.ne.s32.totalorder %s143, %s144
      %p158 = scmp.eq.s32.totalorder %s26, 3
      %p159 = por %p157, %p158
      %p161 = scmp.ne.s32.totalorder %s144, %s160
      %p162 = scmp.eq.s32.totalorder %s26, 0
      %p163 = por %p161, %p162
      %p164 = scmp.le.s32.totalorder 1, %s20
      %p165 = scmp.lt.s32.totalorder %s20, 5
      %p166 = pnand %p164, %p165
      %p167 = pneg %p166
      // Predicated region
      $region9: #{tpu_custom_call.1} parent=5 // pred_check
        _
      $region10: #{tpu_custom_call.1} parent=5 // pred_check_branch
        %169 = sbr.rel (%p166) target = $region12
      $region11: #{tpu_custom_call.1} parent=5 // pred_region
        %s170 = ssub.s32 %s20, 1
        // Predicated region
        $region13: #{tpu_custom_call.1} parent=11 // pred_check
          %p171 = pneg %p67
        $region14: #{tpu_custom_call.1} parent=11 // pred_check_branch
          %173 = sbr.rel (%p171) target = $region16
        $region15: #{tpu_custom_call.1} parent=11 // pred_region
          %s175 = ssub.s32 3072, 3072
          %176 = vsyncadd [#allocation7], %s175
          %s177 = sshll.u32 [#allocation6], 4
          %s178 = int_to_ptr.vmem [resolvable:$true] %s177
          %183 = dma.hbm_to_vmem [thread:$0]  %s1, 3072, %s178, [#allocation7], 192, 192, 12
        $region16: #{tpu_custom_call.1} parent=11 // pred_fallthru
          _
        // Predicated region
        $region17: #{tpu_custom_call.1} parent=11 // pred_check
          %p184 = pneg %p88
        $region18: #{tpu_custom_call.1} parent=11 // pred_check_branch
          %186 = sbr.rel (%p184) target = $region20
        $region19: #{tpu_custom_call.1} parent=11 // pred_region
          _
        $region20: #{tpu_custom_call.1} parent=11 // pred_fallthru
          _
        // Predicated region
        $region21: #{tpu_custom_call.1} parent=11 // pred_check
          %p187 = pneg %p109
        $region22: #{tpu_custom_call.1} parent=11 // pred_check_branch
          %189 = sbr.rel (%p187) target = $region24
        $region23: #{tpu_custom_call.1} parent=11 // pred_region
          %s191 = ssub.s32 16, 16
          %192 = vsyncadd [#allocation5], %s191
          %s194 = sshll.u32 %s3, 4
          %s195 = int_to_ptr.vmem [resolvable:$true] %s194
          %197 = dma.vmem_to_smem %s195, 16, [#allocation8], [#allocation5]
        $region24: #{tpu_custom_call.1} parent=11 // pred_fallthru
          _
        // Predicated region
        $region25: #{tpu_custom_call.1} parent=11 // pred_check
          %p198 = pneg %p130
        $region26: #{tpu_custom_call.1} parent=11 // pred_check_branch
          %200 = sbr.rel (%p198) target = $region28
        $region27: #{tpu_custom_call.1} parent=11 // pred_region
          %s202 = ssub.s32 16, 16
          %203 = vsyncadd [#allocation10], %s202
          %s205 = sshll.u32 %s4, 4
          %s206 = int_to_ptr.vmem [resolvable:$true] %s205
          %208 = dma.vmem_to_smem %s206, 16, [#allocation9], [#allocation10]
        $region28: #{tpu_custom_call.1} parent=11 // pred_fallthru
          _
      $region12: #{tpu_custom_call.1} parent=5 // pred_fallthru
        _
      %p209 = scmp.lt.s32.totalorder %s20, 4
      // Predicated region
      $region29: #{tpu_custom_call.1} parent=5 // pred_check
        %p210 = pneg %p209
      $region30: #{tpu_custom_call.1} parent=5 // pred_check_branch
        %212 = sbr.rel (%p210) target = $region32
      $region31: #{tpu_custom_call.1} parent=5 // pred_region
        // Predicated region
        $region33: #{tpu_custom_call.1} parent=31 // pred_check
          %p213 = pneg %p40
        $region34: #{tpu_custom_call.1} parent=31 // pred_check_branch
          %215 = sbr.rel (%p213) target = $region36
        $region35: #{tpu_custom_call.1} parent=31 // pred_region
          %s216 = sand.u32 %s30, 1
          %s217 = scalar_lea.sflag [#allocation3], %s216
          %s218 = sand.u32 %s30, 1
          %s219 = smul.addr %s218, 16
          %s220 = scalar_lea.vmem [#allocation2], %s219
          %s221 = smul.u32 2, %s20
          %s223 = ssub.s32 256, 256
          %224 = vsyncadd %s217, %s223
          %s225 = smul.addr %s221, 128
          %s226 = scalar_lea.hbm %s0, %s225
          %s227 = sshll.u32 %s220, 4
          %s228 = int_to_ptr.vmem [resolvable:$true] %s227
          %233 = dma.hbm_to_vmem [thread:$0]  %s226, 256, %s228, %s217, 128, 128, 8
        $region36: #{tpu_custom_call.1} parent=31 // pred_fallthru
          _
      $region32: #{tpu_custom_call.1} parent=5 // pred_fallthru
        _
      %p234 = scmp.le.s32.totalorder 1, %s20
      %p235 = scmp.lt.s32.totalorder %s20, 5
      %p236 = pnand %p234, %p235
      %p237 = pneg %p236
      // Predicated region
      $region37: #{tpu_custom_call.1} parent=5 // pred_check
        _
      $region38: #{tpu_custom_call.1} parent=5 // pred_check_branch
        %239 = sbr.rel (%p236) target = $region40
      $region39: #{tpu_custom_call.1} parent=5 // pred_region
        %s240 = ssub.s32 %s20, 1
        %s241 = sand.u32 %s33, 1
        %s242 = scalar_lea.sflag [#allocation3], %s241
        %s243 = sand.u32 %s33, 1
        %s244 = smul.addr %s243, 16
        %s245 = scalar_lea.vmem [#allocation2], %s244
        // Predicated region
        $region41: #{tpu_custom_call.1} parent=39 // pred_check
          %p246 = pneg %p46
        $region42: #{tpu_custom_call.1} parent=39 // pred_check_branch
          %248 = sbr.rel (%p246) target = $region44
        $region43: #{tpu_custom_call.1} parent=39 // pred_region
          %249 = dma.done %s242, 256
        $region44: #{tpu_custom_call.1} parent=39 // pred_fallthru
          _
        // Predicated region
        $region45: #{tpu_custom_call.1} parent=39 // pred_check
          %p250 = pneg %p67
        $region46: #{tpu_custom_call.1} parent=39 // pred_check_branch
          %252 = sbr.rel (%p250) target = $region48
        $region47: #{tpu_custom_call.1} parent=39 // pred_region
          %253 = dma.done [#allocation7], 3072
        $region48: #{tpu_custom_call.1} parent=39 // pred_fallthru
          _
        // Predicated region
        $region49: #{tpu_custom_call.1} parent=39 // pred_check
          %p254 = pneg %p109
        $region50: #{tpu_custom_call.1} parent=39 // pred_check_branch
          %256 = sbr.rel (%p254) target = $region52
        $region51: #{tpu_custom_call.1} parent=39 // pred_region
          %257 = dma.done [#allocation5], 16
        $region52: #{tpu_custom_call.1} parent=39 // pred_fallthru
          _
        // Predicated region
        $region53: #{tpu_custom_call.1} parent=39 // pred_check
          %p258 = pneg %p130
        $region54: #{tpu_custom_call.1} parent=39 // pred_check_branch
          %260 = sbr.rel (%p258) target = $region56
        $region55: #{tpu_custom_call.1} parent=39 // pred_region
          %261 = dma.done [#allocation10], 16
        $region56: #{tpu_custom_call.1} parent=39 // pred_fallthru
          _
        %262 = sfence
        %s263 = sand.u32 %s33, 1
        %s264 = scalar_lea.sflag [#allocation3], %s263
        %s265 = sand.u32 %s33, 1
        %s266 = smul.addr %s265, 16
        %s267 = scalar_lea.vmem [#allocation2], %s266
        %p268 = pneg %p46
        %p269 = pneg %p43
        %p270 = pneg %p67
        %p271 = pneg %p64
        %p272 = pneg %p88
        %p273 = pneg %p85
        %p274 = pneg %p109
        %p275 = pneg %p106
        %p276 = pneg %p130
        %p277 = pneg %p127
        %p278 = pneg %p156
        %p279 = pneg %p153
        %s280 = sand.u32 %s143, 1
        %s281 = scalar_lea.sflag [#allocation4], %s280
        %s282 = sand.u32 %s143, 1
        %s283 = smul.addr %s282, 16
        %s284 = scalar_lea.vmem [#allocation11], %s283
        %s285 = smul.u32 2, %s25
        %s286 = smul.u32 2, %s25
        %v288 = vld [vmem:[%s245] sm:$0xff]
        %v289 = vld [vmem:[%s245 + $0x8] sm:$0xff]
        %v290 = vpack.c.bf16 %v289, %v288
        %v291 = vld [vmem:[#allocation6] sm:$0xff]
        %v292 = vld [vmem:[#allocation6 + $0x8] sm:$0xf]
        %v293 = vld [vmem:[#allocation6 + $0xc] sm:$0xff]
        %v294 = vld [vmem:[#allocation6 + $0x14] sm:$0xf]
        %v295 = vld [vmem:[#allocation6 + $0x18] sm:$0xff]
        %v296 = vld [vmem:[#allocation6 + $0x20] sm:$0xf]
        %v297 = vld [vmem:[#allocation6 + $0x24] sm:$0xff]
        %v298 = vld [vmem:[#allocation6 + $0x2c] sm:$0xf]
        %v299 = vld [vmem:[#allocation6 + $0x30] sm:$0xff]
        %v300 = vld [vmem:[#allocation6 + $0x38] sm:$0xf]
        %v301 = vld [vmem:[#allocation6 + $0x3c] sm:$0xff]
        %v302 = vld [vmem:[#allocation6 + $0x44] sm:$0xf]
        %v303 = vld [vmem:[#allocation6 + $0x48] sm:$0xff]
        %v304 = vld [vmem:[#allocation6 + $0x50] sm:$0xf]
        %v305 = vld [vmem:[#allocation6 + $0x54] sm:$0xff]
        %v306 = vld [vmem:[#allocation6 + $0x5c] sm:$0xf]
        %v307 = vld [vmem:[#allocation6 + $0x60] sm:$0xff]
        %v308 = vld [vmem:[#allocation6 + $0x68] sm:$0xf]
        %v309 = vld [vmem:[#allocation6 + $0x6c] sm:$0xff]
        %v310 = vld [vmem:[#allocation6 + $0x74] sm:$0xf]
        %v311 = vld [vmem:[#allocation6 + $0x78] sm:$0xff]
        %v312 = vld [vmem:[#allocation6 + $0x80] sm:$0xf]
        %v313 = vld [vmem:[#allocation6 + $0x84] sm:$0xff]
        %v314 = vld [vmem:[#allocation6 + $0x8c] sm:$0xf]
        %v315 = vld [vmem:[#allocation6 + $0x90] sm:$0xff]
        %v316 = vld [vmem:[#allocation6 + $0x98] sm:$0xf]
        %v317 = vld [vmem:[#allocation6 + $0x9c] sm:$0xff]
        %v318 = vld [vmem:[#allocation6 + $0xa4] sm:$0xf]
        %v319 = vld [vmem:[#allocation6 + $0xa8] sm:$0xff]
        %v320 = vld [vmem:[#allocation6 + $0xb0] sm:$0xf]
        %v321 = vld [vmem:[#allocation6 + $0xb4] sm:$0xff]
        %v322 = vld [vmem:[#allocation6 + $0xbc] sm:$0xf]
        %v355 = vunpack.c.l.b16 %v291
        %v356 = vunpack.c.h.b16 %v291
        %v357 = vunpack.c.l.b16 %v292
        %v358 = vunpack.c.l.b16 %v293
        %v359 = vunpack.c.h.b16 %v293
        %v360 = vunpack.c.l.b16 %v294
        %v361 = vunpack.c.l.b16 %v295
        %v362 = vunpack.c.h.b16 %v295
        %v363 = vunpack.c.l.b16 %v296
        %v364 = vunpack.c.l.b16 %v297
        %v365 = vunpack.c.h.b16 %v297
        %v366 = vunpack.c.l.b16 %v298
        %v367 = vunpack.c.l.b16 %v299
        %v368 = vunpack.c.h.b16 %v299
        %v369 = vunpack.c.l.b16 %v300
        %v370 = vunpack.c.l.b16 %v301
        %v371 = vunpack.c.h.b16 %v301
        %v372 = vunpack.c.l.b16 %v302
        %v373 = vunpack.c.l.b16 %v303
        %v374 = vunpack.c.h.b16 %v303
        %v375 = vunpack.c.l.b16 %v304
        %v376 = vunpack.c.l.b16 %v305
        %v377 = vunpack.c.h.b16 %v305
        %v378 = vunpack.c.l.b16 %v306
        %v379 = vunpack.c.l.b16 %v307
        %v380 = vunpack.c.h.b16 %v307
        %v381 = vunpack.c.l.b16 %v308
        %v382 = vunpack.c.l.b16 %v309
        %v383 = vunpack.c.h.b16 %v309
        %v384 = vunpack.c.l.b16 %v310
        %v385 = vunpack.c.l.b16 %v311
        %v386 = vunpack.c.h.b16 %v311
        %v387 = vunpack.c.l.b16 %v312
        %v388 = vunpack.c.l.b16 %v313
        %v389 = vunpack.c.h.b16 %v313
        %v390 = vunpack.c.l.b16 %v314
        %v391 = vunpack.c.l.b16 %v315
        %v392 = vunpack.c.h.b16 %v315
        %v393 = vunpack.c.l.b16 %v316
        %v394 = vunpack.c.l.b16 %v317
        %v395 = vunpack.c.h.b16 %v317
        %v396 = vunpack.c.l.b16 %v318
        %v397 = vunpack.c.l.b16 %v319
        %v398 = vunpack.c.h.b16 %v319
        %v399 = vunpack.c.l.b16 %v320
        %v400 = vunpack.c.l.b16 %v321
        %v401 = vunpack.c.h.b16 %v321
        %v402 = vunpack.c.l.b16 %v322
        %v403 = vpack.c.b16 %v358, %v355
        %v404 = vpack.c.b16 %v359, %v356
        %v405 = vpack.c.b16 %v360, %v357
        %v406 = vpack.c.b16 %v364, %v361
        %v407 = vpack.c.b16 %v365, %v362
        %v408 = vpack.c.b16 %v366, %v363
        %v409 = vpack.c.b16 %v370, %v367
        %v410 = vpack.c.b16 %v371, %v368
        %v411 = vpack.c.b16 %v372, %v369
        %v412 = vpack.c.b16 %v376, %v373
        %v413 = vpack.c.b16 %v377, %v374
        %v414 = vpack.c.b16 %v378, %v375
        %v415 = vpack.c.b16 %v382, %v379
        %v416 = vpack.c.b16 %v383, %v380
        %v417 = vpack.c.b16 %v384, %v381
        %v418 = vpack.c.b16 %v388, %v385
        %v419 = vpack.c.b16 %v389, %v386
        %v420 = vpack.c.b16 %v390, %v387
        %v421 = vpack.c.b16 %v394, %v391
        %v422 = vpack.c.b16 %v395, %v392
        %v423 = vpack.c.b16 %v396, %v393
        %v424 = vpack.c.b16 %v400, %v397
        %v425 = vpack.c.b16 %v401, %v398
        %v426 = vpack.c.b16 %v402, %v399
        %451 = vmatprep.subr.bf16.mxu0 %v404
        %452 = vmatpush1.bf16.msra.mxu0 %v403
        %453 = vmatprep.subr.bf16.mxu0 %v407
        %454 = vmatpush1.bf16.msra.mxu0 %v406
        %455 = vmatprep.subr.bf16.mxu0 %v410
        %456 = vmatpush1.bf16.msra.mxu0 %v409
        %457 = vmatprep.subr.bf16.mxu0 %v413
        %458 = vmatpush1.bf16.msra.mxu0 %v412
        %459 = vmatprep.subr.bf16.mxu0 %v416
        %460 = vmatpush1.bf16.msra.mxu0 %v415
        %461 = vmatprep.subr.bf16.mxu0 %v419
        %462 = vmatpush1.bf16.msra.mxu0 %v418
        %463 = vmatprep.subr.bf16.mxu0 %v422
        %464 = vmatpush1.bf16.msra.mxu0 %v421
        %465 = vmatprep.subr.bf16.mxu0 %v425
        %466 = vmatpush1.bf16.msra.mxu0 %v424
        %467 = vmatprep.subr.bf16.mxu0 0
        %468 = vmatpush1.bf16.msra.mxu0 0
        %469 = vmatprep.subr.bf16.mxu0 0
        %470 = vmatpush1.bf16.msra.mxu0 0
        %471 = vmatprep.subr.bf16.mxu0 0
        %472 = vmatpush1.bf16.msra.mxu0 0
        %473 = vmatprep.subr.bf16.mxu0 0
        %474 = vmatpush1.bf16.msra.mxu0 0
        %475 = vmatprep.subr.bf16.mxu0 0
        %476 = vmatpush1.bf16.msra.mxu0 0
        %477 = vmatprep.subr.bf16.mxu0 0
        %478 = vmatpush1.bf16.msra.mxu0 0
        %479 = vmatprep.subr.bf16.mxu0 0
        %480 = vmatpush1.bf16.msra.mxu0 0
        %481 = vmatprep.subr.bf16.mxu0 0
        %482 = vmatpush1.bf16.msra.mxu0 0
        %483 = vmatprep.mubr.bf16.mxu0 0
        %484 = vmatmul.mubr.bf16.gmra.mrb[0].mxu0 %v290
        %v485 = vpop.f32.mrb[0].mxu0
        %v486 = vadd.f32 0.0, %v485
        %v487 = vpop.f32.mrb[0].mxu0
        %v488 = vadd.f32 0.0, %v487
        %v489 = vpop.f32.mrb[0].mxu0
        %v490 = vadd.f32 0.0, %v489
        %v491 = vpop.f32.mrb[0].mxu0
        %v492 = vadd.f32 0.0, %v491
        %493 = vdwg.mxu0
        %494 = vmatprep.subr.bf16.mxu0 0
        %495 = vmatpush1.bf16.msra.mxu0 %v405
        %496 = vmatprep.subr.bf16.mxu0 0
        %497 = vmatpush1.bf16.msra.mxu0 %v408
        %498 = vmatprep.subr.bf16.mxu0 0
        %499 = vmatpush1.bf16.msra.mxu0 %v411
        %500 = vmatprep.subr.bf16.mxu0 0
        %501 = vmatpush1.bf16.msra.mxu0 %v414
        %502 = vmatprep.subr.bf16.mxu0 0
        %503 = vmatpush1.bf16.msra.mxu0 %v417
        %504 = vmatprep.subr.bf16.mxu0 0
        %505 = vmatpush1.bf16.msra.mxu0 %v420
        %506 = vmatprep.subr.bf16.mxu0 0
        %507 = vmatpush1.bf16.msra.mxu0 %v423
        %508 = vmatprep.subr.bf16.mxu0 0
        %509 = vmatpush1.bf16.msra.mxu0 %v426
        %510 = vmatprep.subr.bf16.mxu0 0
        %511 = vmatpush1.bf16.msra.mxu0 0
        %512 = vmatprep.subr.bf16.mxu0 0
        %513 = vmatpush1.bf16.msra.mxu0 0
        %514 = vmatprep.subr.bf16.mxu0 0
        %515 = vmatpush1.bf16.msra.mxu0 0
        %516 = vmatprep.subr.bf16.mxu0 0
        %517 = vmatpush1.bf16.msra.mxu0 0
        %518 = vmatprep.subr.bf16.mxu0 0
        %519 = vmatpush1.bf16.msra.mxu0 0
        %520 = vmatprep.subr.bf16.mxu0 0
        %521 = vmatpush1.bf16.msra.mxu0 0
        %522 = vmatprep.subr.bf16.mxu0 0
        %523 = vmatpush1.bf16.msra.mxu0 0
        %524 = vmatprep.subr.bf16.mxu0 0
        %525 = vmatpush1.bf16.msra.mxu0 0
        %526 = vmatprep.mubr.bf16.mxu0 0
        %527 = vmatmul.mubr.bf16.gmra.mrb[0].mxu0 %v290
        %v528 = vpop.f32.mrb[0].mxu0
        %v529 = vadd.f32 0.0, %v528
        %v530 = vpop.f32.mrb[0].mxu0
        %v531 = vpop.f32.mrb[0].mxu0
        %v532 = vadd.f32 0.0, %v531
        %v533 = vpop.f32.mrb[0].mxu0
        %534 = vdwg.mxu0
        %s535 = sld [smem:[#allocation8]]
        %v536 = vstv %s535
        %v537 = vadd.f32 %v486, %v536
        %v538 = vadd.f32 %v490, %v536
        %v539 = vpack.c.bf16 %v538, %v537
        %v540 = vtanh.bf16.pop %v539
        %v541 = vld [vmem:[%s2] sm:$0x1]
        %v542 = vunpack.c.l.bf16 %v540
        %v543 = vunpack.c.h.bf16 %v540
        %v544 = vlaneseq
        %v545 = vshrl.u32 %v544, 7
        %v546 = vsub.s32 0, %v545
        %v547 = vrot.slane %v541, %v546
        %v548 = vmul.f32 %v547, %v542
        %v549 = vmul.f32 %v547, %v543
        %v550 = vadd.f32 %v288, %v548
        %v551 = vadd.f32 %v289, %v549
        %s552 = sld [smem:[#allocation8 + $0x1]]
        %v553 = vstv %s552
        %v554 = vadd.f32 %v488, %v553
        %v555 = vadd.f32 %v492, %v553
        %s556 = sld [smem:[#allocation9 + $0x1]]
        %v557 = vstv %s556
        %v558 = vmul.f32 %v557, %v542
        %v559 = vmul.f32 %v557, %v543
        %v560 = vadd.f32 %v554, %v558
        %v561 = vadd.f32 %v555, %v559
        %v562 = vpack.c.bf16 %v561, %v560
        %v563 = vtanh.bf16.pop %v562
        %v564 = vld [vmem:[%s2 + $0x1] sm:$0x1]
        %v565 = vunpack.c.l.bf16 %v563
        %v566 = vunpack.c.h.bf16 %v563
        %v567 = vlaneseq
        %v568 = vshrl.u32 %v567, 7
        %v569 = vsub.s32 0, %v568
        %v570 = vrot.slane %v564, %v569
        %v571 = vmul.f32 %v570, %v565
        %v572 = vmul.f32 %v570, %v566
        %v573 = vadd.f32 %v550, %v571
        %v574 = vadd.f32 %v551, %v572
        %s575 = sld [smem:[#allocation8 + $0x2]]
        %v576 = vstv %s575
        %v577 = vadd.f32 %v529, %v576
        %v578 = vadd.f32 %v532, %v576
        %s579 = sld [smem:[#allocation9 + $0x2]]
        %v580 = vstv %s579
        %v581 = vmul.f32 %v580, %v542
        %v582 = vmul.f32 %v580, %v543
        %v583 = vadd.f32 %v577, %v581
        %v584 = vadd.f32 %v578, %v582
        %s585 = sld [smem:[#allocation9 + $0x5]]
        %v586 = vstv %s585
        %v587 = vmul.f32 %v586, %v565
        %v588 = vmul.f32 %v586, %v566
        %v589 = vadd.f32 %v583, %v587
        %v590 = vadd.f32 %v584, %v588
        %v591 = vpack.c.bf16 %v590, %v589
        %v592 = vtanh.bf16.pop %v591
        %v593 = vld [vmem:[%s2 + $0x2] sm:$0x1]
        %v594 = vunpack.c.l.bf16 %v592
        %v595 = vunpack.c.h.bf16 %v592
        %v596 = vlaneseq
        %v597 = vshrl.u32 %v596, 7
        %v598 = vsub.s32 0, %v597
        %v599 = vrot.slane %v593, %v598
        %v600 = vmul.f32 %v599, %v594
        %v601 = vmul.f32 %v599, %v595
        %v602 = vadd.f32 %v573, %v600
        %v603 = vadd.f32 %v574, %v601
        %604 = vst [vmem:[%s284] sm:$0xff] %v602
        %605 = vst [vmem:[%s284 + $0x8] sm:$0xff] %v603
        %s606 = sand.u32 %s143, 1
        %s607 = scalar_lea.sflag [#allocation4], %s606
        %s608 = sand.u32 %s143, 1
        %s609 = smul.addr %s608, 16
        %s610 = scalar_lea.vmem [#allocation11], %s609
        // Predicated region
        $region57: #{tpu_custom_call.1} parent=39 // pred_check
          %p611 = pneg %p153
        $region58: #{tpu_custom_call.1} parent=39 // pred_check_branch
          %613 = sbr.rel (%p611) target = $region60
        $region59: #{tpu_custom_call.1} parent=39 // pred_region
          %s614 = smul.u32 2, %s25
          %s616 = ssub.s32 256, 256
          %617 = vsyncadd %s607, %s616
          %s618 = smul.addr %s614, 128
          %s619 = scalar_lea.hbm %s5, %s618
          %s620 = sshll.u32 %s610, 4
          %s621 = int_to_ptr.vmem [resolvable:$true] %s620
          %626 = dma.vmem_to_hbm [thread:$0]  %s621, 256, %s619, %s607, 128, 128, 8
        $region60: #{tpu_custom_call.1} parent=39 // pred_fallthru
          _
      $region40: #{tpu_custom_call.1} parent=5 // pred_fallthru
        _
      %p627 = scmp.le.s32.totalorder 2, %s20
      // Predicated region
      $region61: #{tpu_custom_call.1} parent=5 // pred_check
        %p628 = pneg %p627
      $region62: #{tpu_custom_call.1} parent=5 // pred_check_branch
        %630 = sbr.rel (%p628) target = $region64
      $region63: #{tpu_custom_call.1} parent=5 // pred_region
        %s631 = ssub.s32 %s20, 2
        // Predicated region
        $region65: #{tpu_custom_call.1} parent=63 // pred_check
          %p632 = pneg %p159
        $region66: #{tpu_custom_call.1} parent=63 // pred_check_branch
          %634 = sbr.rel (%p632) target = $region68
        $region67: #{tpu_custom_call.1} parent=63 // pred_region
          %s635 = sand.u32 %s144, 1
          %s636 = scalar_lea.sflag [#allocation4], %s635
          %s637 = sand.u32 %s144, 1
          %s638 = smul.addr %s637, 16
          %s639 = scalar_lea.vmem [#allocation11], %s638
          %640 = dma.done %s636, 256
        $region68: #{tpu_custom_call.1} parent=63 // pred_fallthru
          _
      $region64: #{tpu_custom_call.1} parent=5 // pred_fallthru
        _
    $region6: #{tpu_custom_call.1} parent=1 // loop_footer
      %s24 = sadd.s32 1, %s20
    $region7: #{tpu_custom_call.1} parent=1 // loop_footer_branch
      %19 = sbr.rel target = $region3
    $region8: #{tpu_custom_call.1} parent=1 // loop_exit
      _
    %641 = vsyncpa [#allocation3], 1
    %s642 = scalar_lea.sflag [#allocation3], 1
    %643 = vsyncpa %s642, 1
    %644 = vsyncpa [#allocation7], 1
    %645 = vsyncpa [#allocation4], 1
    %s646 = scalar_lea.sflag [#allocation4], 1
    %647 = vsyncpa %s646, 1
    %648 = vsyncpa [#allocation5], 1
    %s649 = scalar_lea.sflag [#allocation5], 1
    %650 = vsyncpa %s649, 1
    %651 = vsyncpa [#allocation10], 1

</llo_original>
